<compile_context>
chip_gen: v6e
topology: v6e:2x2x1
jax: 0.10.0
libtpu: 0.0.40
codegen_flags: <defaults>
</compile_context>

<pallas_src>
import functools

import jax
import jax.numpy as jnp
from jax.experimental import pallas as pl
from jax.experimental.pallas import tpu as pltpu

NEG_SLOPE = 0.1  # matches nn.LeakyReLU(negative_slope=0.1) in my_VAE


def _leaky_relu(x):
    # slope in (0,1) -> identical to where(x>0, x, s*x), one max instead of cmp+sel
    return jnp.maximum(x, NEG_SLOPE * x)


def _bf16(x):
    return x.astype(jnp.bfloat16)


def _vae_kernel(latent_size,
                x_ref, eps_ref,
                w1_ref, b1_ref,
                w2_ref, b2_ref,
                wmulv_ref, bmulv_ref,
                wd1_ref, bd1_ref,
                wd2_ref, bd2_ref,
                xhat_ref, mu_ref, logvar_ref):
    L = latent_size
    x = _bf16(x_ref[...])     # f32 tile read from HBM once, cast in VMEM
    eps = eps_ref[...]        # (TB, L) f32

    # ---- encoder: bf16 MXU matmuls, f32 accumulation, f32 elementwise ----
    h = _leaky_relu(
        jnp.dot(x, w1_ref[...], preferred_element_type=jnp.float32) + b1_ref[...])
    h = _leaky_relu(
        jnp.dot(_bf16(h), w2_ref[...], preferred_element_type=jnp.float32) + b2_ref[...])

    # ---- fused [mu | logvar] head: one lane-dense (TB, 2L) matmul ----
    mulv = (jnp.dot(_bf16(h), wmulv_ref[...], preferred_element_type=jnp.float32)
            + bmulv_ref[...])
    mu = mulv[:, :L]
    logvar = mulv[:, L:]
    mu_ref[...] = mu            # split stored in-kernel -> no wrapper slices
    logvar_ref[...] = logvar

    # ---- reparameterize (eps supplied externally for determinism; could be
    # generated in-kernel with pltpu.prng_seed + stateful_normal to save the
    # (B, L) f32 input stream if determinism vs. torch is not required) ----
    std = jnp.exp(0.5 * logvar)
    z = mu + eps * std

    # ---- decoder ----
    hd = _leaky_relu(
        jnp.dot(_bf16(z), wd1_ref[...], preferred_element_type=jnp.float32) + bd1_ref[...])
    logits = (jnp.dot(_bf16(hd), wd2_ref[...], preferred_element_type=jnp.float32)
              + bd2_ref[...])
    xhat_ref[...] = jax.nn.sigmoid(logits).astype(xhat_ref.dtype)   # bf16 store


@functools.partial(
    jax.jit,
    static_argnames=("input_size", "hidden_size", "latent_size", "batch_tile"))
def vae_forward(x_img, eps, params, *, input_size, hidden_size, latent_size,
                batch_tile=1024):
    B = x_img.shape[0]
    # metadata-only reshape; input stays f32 in HBM (cast to bf16 inside kernel)
    x = x_img.reshape(B, -1).astype(jnp.float32)
    eps = eps.astype(jnp.float32)

    weights = params  # (w1,b1,w2,b2,wmulv,bmulv,wd1,bd1,wd2,bd2), weights bf16 / biases f32
    kernel = functools.partial(_vae_kernel, latent_size)
    out_shapes = (jax.ShapeDtypeStruct((B, input_size), jnp.bfloat16),   # x_hat
                  jax.ShapeDtypeStruct((B, latent_size), jnp.float32),   # mu
                  jax.ShapeDtypeStruct((B, latent_size), jnp.float32))   # logvar

    if B <= batch_tile:
        # Small batch: no grid -> no grid-loop / double-buffer overhead; whole
        # arrays resident in VMEM as full-array blocks (no padding needed).
        vmem = pl.BlockSpec(memory_space=pltpu.MemorySpace.VMEM)
        xhat, mu, logvar = pl.pallas_call(
            kernel,
            out_shape=out_shapes,
            in_specs=[vmem] * 12,
            out_specs=(vmem, vmem, vmem),
        )(x, eps, *weights)
    else:
        # Large batch: tile the batch; weights resident (block 0 every step).
        TB = max(8, (min(batch_tile, B) // 8) * 8)
        nt = pl.cdiv(B, TB)
        # v7x megacore: prefer an even (>=2) grid so the "parallel" batch axis
        # shards evenly across both TensorCores (harmless on v5e/v6e).
        if nt > 1 and nt % 2 == 1:
            TB = max(8, pl.cdiv(pl.cdiv(B, nt + 1), 8) * 8)
            nt = pl.cdiv(B, TB)

        batch = lambda i: (i, 0)
        resident = lambda i: (0, 0)
        in_specs = ([pl.BlockSpec((TB, input_size), batch),
                     pl.BlockSpec((TB, latent_size), batch)]
                    + [pl.BlockSpec(w.shape, resident) for w in weights])
        out_specs = (pl.BlockSpec((TB, input_size), batch),
                     pl.BlockSpec((TB, latent_size), batch),
                     pl.BlockSpec((TB, latent_size), batch))
        xhat, mu, logvar = pl.pallas_call(
            kernel,
            out_shape=out_shapes,
            grid=(nt,),                      # ragged last block handled by Pallas
            in_specs=in_specs,
            out_specs=out_specs,
            compiler_params=pltpu.CompilerParams(
                dimension_semantics=("parallel",),
                vmem_limit_bytes=32 * 1024 * 1024),  # headroom for v5e's 16 MiB default
        )(x, eps, *weights)

    return xhat, mu, logvar


def init_params(key, input_size, hidden_size, latent_size):
    """Deterministic synthetic init (PyTorch-Linear-like), weights as (in, out)."""
    def linear(k, fan_in, fan_out):
        kw, kb = jax.random.split(k)
        scale = 1.0 / jnp.sqrt(fan_in)
        w = jax.random.uniform(kw, (fan_in, fan_out), jnp.float32, -scale, scale)
        b = jax.random.uniform(kb, (1, fan_out), jnp.float32, -scale, scale)
        return w, b

    keys = jax.random.split(key, 6)
    w1, b1 = linear(keys[0], input_size, hidden_size)     # en_1
    w2, b2 = linear(keys[1], hidden_size, hidden_size)    # en_2
    wmu, bmu = linear(keys[2], hidden_size, latent_size)  # en_mu
    wlv, blv = linear(keys[3], hidden_size, latent_size)  # en_logvar
    wd1, bd1 = linear(keys[4], latent_size, hidden_size)  # de_1
    wd2, bd2 = linear(keys[5], hidden_size, input_size)   # de_2
    return dict(w1=w1, b1=b1, w2=w2, b2=b2, wmu=wmu, bmu=bmu,
                wlv=wlv, blv=blv, wd1=wd1, bd1=bd1, wd2=wd2, bd2=bd2)


def pack_params(p):
    """Fuse mu/logvar head, store weights in bf16, keep biases f32."""
    wmulv = jnp.concatenate([p["wmu"], p["wlv"]], axis=1)   # (hidden, 2*latent)
    bmulv = jnp.concatenate([p["bmu"], p["blv"]], axis=1)   # (1, 2*latent)
    return (_bf16(p["w1"]), p["b1"],
            _bf16(p["w2"]), p["b2"],
            _bf16(wmulv), bmulv,
            _bf16(p["wd1"]), p["bd1"],
            _bf16(p["wd2"]), p["bd2"])


def vae_reference(x_img, eps, packed, *, latent_size):
    """Pure-JAX reference using the same bf16-matmul / f32-accumulate math."""
    (w1, b1, w2, b2, wmulv, bmulv, wd1, bd1, wd2, bd2) = packed
    B = x_img.shape[0]
    x = x_img.reshape(B, -1).astype(jnp.float32)
    dot = lambda a, w: jnp.dot(_bf16(a), w, preferred_element_type=jnp.float32)
    h = _leaky_relu(dot(x, w1) + b1)
    h = _leaky_relu(dot(h, w2) + b2)
    mulv = dot(h, wmulv) + bmulv
    mu, logvar = mulv[:, :latent_size], mulv[:, latent_size:]
    z = mu + eps * jnp.exp(0.5 * logvar)
    hd = _leaky_relu(dot(z, wd1) + bd1)
    x_hat = jax.nn.sigmoid(dot(hd, wd2) + bd2)
    return x_hat, mu, logvar


if __name__ == "__main__":
    # "image" is (B, 1, 16, 16) NCHW -> flattened input_size = 256
    B, C, H, W = 8, 1, 16, 16
    input_size = C * H * W
    hidden_size = 128
    latent_size = 64

    root = jax.random.PRNGKey(0)
    k_x, k_eps, k_params, k_x2, k_eps2 = jax.random.split(root, 5)

    x_img = jax.random.uniform(k_x, (B, C, H, W), jnp.float32)
    eps = jax.random.normal(k_eps, (B, latent_size), jnp.float32)
    params = pack_params(init_params(k_params, input_size, hidden_size, latent_size))

    # ---- small-batch (gridless, whole-array-in-VMEM) path ----
    x_hat, mu, logvar = vae_forward(
        x_img, eps, params,
        input_size=input_size, hidden_size=hidden_size, latent_size=latent_size)
    jax.block_until_ready((x_hat, mu, logvar))

    assert x_hat.shape == (B, input_size) and x_hat.dtype == jnp.bfloat16
    assert mu.shape == (B, latent_size)
    assert logvar.shape == (B, latent_size)
    assert bool(jnp.all((x_hat.astype(jnp.float32) >= 0.0)
                        & (x_hat.astype(jnp.float32) <= 1.0)))

    rx, rmu, rlv = vae_reference(x_img, eps, params, latent_size=latent_size)
    assert bool(jnp.allclose(x_hat.astype(jnp.float32), rx, atol=2e-2, rtol=2e-2))
    assert bool(jnp.allclose(mu, rmu, atol=2e-2, rtol=2e-2))
    assert bool(jnp.allclose(logvar, rlv, atol=2e-2, rtol=2e-2))

    # ---- batched (grid-tiled, "parallel" batch axis, ragged last block) path ----
    B2 = 600  # not a multiple of the tile -> exercises ragged-last-block handling
    x_img2 = jax.random.uniform(k_x2, (B2, C, H, W), jnp.float32)
    eps2 = jax.random.normal(k_eps2, (B2, latent_size), jnp.float32)
    x_hat2, mu2, logvar2 = vae_forward(
        x_img2, eps2, params,
        input_size=input_size, hidden_size=hidden_size, latent_size=latent_size,
        batch_tile=256)
    jax.block_until_ready((x_hat2, mu2, logvar2))

    assert x_hat2.shape == (B2, input_size)
    assert mu2.shape == (B2, latent_size)
    assert logvar2.shape == (B2, latent_size)
    rx2, rmu2, rlv2 = vae_reference(x_img2, eps2, params, latent_size=latent_size)
    assert bool(jnp.allclose(x_hat2.astype(jnp.float32), rx2, atol=2e-2, rtol=2e-2))
    assert bool(jnp.allclose(mu2, rmu2, atol=2e-2, rtol=2e-2))
    assert bool(jnp.allclose(logvar2, rlv2, atol=2e-2, rtol=2e-2))

    print("KERNEL_OK")
</pallas_src>

<mosaic_0001>
module attributes {stable_mosaic.version = 11 : i64} {
  func.func @_vae_kernel(%arg0: memref<8x256xf32, #tpu.memory_space<vmem>>, %arg1: memref<8x64xf32, #tpu.memory_space<vmem>>, %arg2: memref<256x128xbf16, #tpu.memory_space<vmem>>, %arg3: memref<1x128xf32, #tpu.memory_space<vmem>>, %arg4: memref<128x128xbf16, #tpu.memory_space<vmem>>, %arg5: memref<1x128xf32, #tpu.memory_space<vmem>>, %arg6: memref<128x128xbf16, #tpu.memory_space<vmem>>, %arg7: memref<1x128xf32, #tpu.memory_space<vmem>>, %arg8: memref<64x128xbf16, #tpu.memory_space<vmem>>, %arg9: memref<1x128xf32, #tpu.memory_space<vmem>>, %arg10: memref<128x256xbf16, #tpu.memory_space<vmem>>, %arg11: memref<1x256xf32, #tpu.memory_space<vmem>>, %arg12: memref<8x256xbf16, #tpu.memory_space<vmem>>, %arg13: memref<8x64xf32, #tpu.memory_space<vmem>>, %arg14: memref<8x64xf32, #tpu.memory_space<vmem>>) attributes {dimension_semantics = [], scalar_prefetch = 0 : i64, scratch_operands = 0 : i64, tpu.core_type = #tpu.core_type<tc>} {
    %c0 = arith.constant 0 : index
    %c0_0 = arith.constant 0 : index
    %0 = vector.load %arg0[%c0, %c0_0] : memref<8x256xf32, #tpu.memory_space<vmem>>, vector<8x256xf32>
    %1 = arith.truncf %0 : vector<8x256xf32> to vector<8x256xbf16>
    %c0_1 = arith.constant 0 : index
    %c0_2 = arith.constant 0 : index
    %2 = vector.load %arg1[%c0_1, %c0_2] : memref<8x64xf32, #tpu.memory_space<vmem>>, vector<8x64xf32>
    %c0_3 = arith.constant 0 : index
    %c0_4 = arith.constant 0 : index
    %3 = vector.load %arg2[%c0_3, %c0_4] : memref<256x128xbf16, #tpu.memory_space<vmem>>, vector<256x128xbf16>
    %cst = arith.constant dense<0.000000e+00> : vector<8x128xf32>
    %4 = tpu.matmul %1, %3, %cst {dimension_numbers = #tpu.dot_dimension_numbers<[1], [0], [0], [1], [0, 0, 1, 1], [], []>} : vector<8x256xbf16>, vector<256x128xbf16>, vector<8x128xf32> -> vector<8x128xf32>
    %c0_5 = arith.constant 0 : index
    %c0_6 = arith.constant 0 : index
    %5 = vector.load %arg3[%c0_5, %c0_6] : memref<1x128xf32, #tpu.memory_space<vmem>>, vector<1x128xf32>
    %6 = vector.broadcast %5 : vector<1x128xf32> to vector<8x128xf32>
    %7 = arith.addf %4, %6 : vector<8x128xf32>
    %cst_7 = arith.constant 1.000000e-01 : f32
    %8 = vector.broadcast %cst_7 : f32 to vector<8x128xf32>
    %9 = arith.mulf %8, %7 : vector<8x128xf32>
    %10 = arith.maximumf %7, %9 : vector<8x128xf32>
    %11 = arith.truncf %10 : vector<8x128xf32> to vector<8x128xbf16>
    %c0_8 = arith.constant 0 : index
    %c0_9 = arith.constant 0 : index
    %12 = vector.load %arg4[%c0_8, %c0_9] : memref<128x128xbf16, #tpu.memory_space<vmem>>, vector<128x128xbf16>
    %cst_10 = arith.constant dense<0.000000e+00> : vector<8x128xf32>
    %13 = tpu.matmul %11, %12, %cst_10 {dimension_numbers = #tpu.dot_dimension_numbers<[1], [0], [0], [1], [0, 0, 1, 1], [], []>} : vector<8x128xbf16>, vector<128x128xbf16>, vector<8x128xf32> -> vector<8x128xf32>
    %c0_11 = arith.constant 0 : index
    %c0_12 = arith.constant 0 : index
    %14 = vector.load %arg5[%c0_11, %c0_12] : memref<1x128xf32, #tpu.memory_space<vmem>>, vector<1x128xf32>
    %15 = vector.broadcast %14 : vector<1x128xf32> to vector<8x128xf32>
    %16 = arith.addf %13, %15 : vector<8x128xf32>
    %cst_13 = arith.constant 1.000000e-01 : f32
    %17 = vector.broadcast %cst_13 : f32 to vector<8x128xf32>
    %18 = arith.mulf %17, %16 : vector<8x128xf32>
    %19 = arith.maximumf %16, %18 : vector<8x128xf32>
    %20 = arith.truncf %19 : vector<8x128xf32> to vector<8x128xbf16>
    %c0_14 = arith.constant 0 : index
    %c0_15 = arith.constant 0 : index
    %21 = vector.load %arg6[%c0_14, %c0_15] : memref<128x128xbf16, #tpu.memory_space<vmem>>, vector<128x128xbf16>
    %cst_16 = arith.constant dense<0.000000e+00> : vector<8x128xf32>
    %22 = tpu.matmul %20, %21, %cst_16 {dimension_numbers = #tpu.dot_dimension_numbers<[1], [0], [0], [1], [0, 0, 1, 1], [], []>} : vector<8x128xbf16>, vector<128x128xbf16>, vector<8x128xf32> -> vector<8x128xf32>
    %c0_17 = arith.constant 0 : index
    %c0_18 = arith.constant 0 : index
    %23 = vector.load %arg7[%c0_17, %c0_18] : memref<1x128xf32, #tpu.memory_space<vmem>>, vector<1x128xf32>
    %24 = vector.broadcast %23 : vector<1x128xf32> to vector<8x128xf32>
    %25 = arith.addf %22, %24 : vector<8x128xf32>
    %26 = vector.extract_strided_slice %25 {offsets = [0, 0], sizes = [8, 64], strides = [1, 1]} : vector<8x128xf32> to vector<8x64xf32>
    %27 = vector.extract_strided_slice %25 {offsets = [0, 64], sizes = [8, 64], strides = [1, 1]} : vector<8x128xf32> to vector<8x64xf32>
    %c0_19 = arith.constant 0 : index
    %c0_20 = arith.constant 0 : index
    %28 = vector.load %arg13[%c0_19, %c0_20] : memref<8x64xf32, #tpu.memory_space<vmem>>, vector<8x64xf32>
    tpu.vector_store %arg13[%c0_19, %c0_20], %26 {strides = array<i32>} : memref<8x64xf32, #tpu.memory_space<vmem>>, vector<8x64xf32>,
    %c0_21 = arith.constant 0 : index
    %c0_22 = arith.constant 0 : index
    %29 = vector.load %arg14[%c0_21, %c0_22] : memref<8x64xf32, #tpu.memory_space<vmem>>, vector<8x64xf32>
    tpu.vector_store %arg14[%c0_21, %c0_22], %27 {strides = array<i32>} : memref<8x64xf32, #tpu.memory_space<vmem>>, vector<8x64xf32>,
    %cst_23 = arith.constant 5.000000e-01 : f32
    %30 = vector.broadcast %cst_23 : f32 to vector<8x64xf32>
    %31 = arith.mulf %30, %27 : vector<8x64xf32>
    %32 = math.exp %31 : vector<8x64xf32>
    %33 = arith.mulf %2, %32 : vector<8x64xf32>
    %34 = arith.addf %26, %33 : vector<8x64xf32>
    %35 = arith.truncf %34 : vector<8x64xf32> to vector<8x64xbf16>
    %c0_24 = arith.constant 0 : index
    %c0_25 = arith.constant 0 : index
    %36 = vector.load %arg8[%c0_24, %c0_25] : memref<64x128xbf16, #tpu.memory_space<vmem>>, vector<64x128xbf16>
    %cst_26 = arith.constant dense<0.000000e+00> : vector<8x128xf32>
    %37 = tpu.matmul %35, %36, %cst_26 {dimension_numbers = #tpu.dot_dimension_numbers<[1], [0], [0], [1], [0, 0, 1, 1], [], []>} : vector<8x64xbf16>, vector<64x128xbf16>, vector<8x128xf32> -> vector<8x128xf32>
    %c0_27 = arith.constant 0 : index
    %c0_28 = arith.constant 0 : index
    %38 = vector.load %arg9[%c0_27, %c0_28] : memref<1x128xf32, #tpu.memory_space<vmem>>, vector<1x128xf32>
    %39 = vector.broadcast %38 : vector<1x128xf32> to vector<8x128xf32>
    %40 = arith.addf %37, %39 : vector<8x128xf32>
    %cst_29 = arith.constant 1.000000e-01 : f32
    %41 = vector.broadcast %cst_29 : f32 to vector<8x128xf32>
    %42 = arith.mulf %41, %40 : vector<8x128xf32>
    %43 = arith.maximumf %40, %42 : vector<8x128xf32>
    %44 = arith.truncf %43 : vector<8x128xf32> to vector<8x128xbf16>
    %c0_30 = arith.constant 0 : index
    %c0_31 = arith.constant 0 : index
    %45 = vector.load %arg10[%c0_30, %c0_31] : memref<128x256xbf16, #tpu.memory_space<vmem>>, vector<128x256xbf16>
    %cst_32 = arith.constant dense<0.000000e+00> : vector<8x256xf32>
    %46 = tpu.matmul %44, %45, %cst_32 {dimension_numbers = #tpu.dot_dimension_numbers<[1], [0], [0], [1], [0, 0, 1, 1], [], []>} : vector<8x128xbf16>, vector<128x256xbf16>, vector<8x256xf32> -> vector<8x256xf32>
    %c0_33 = arith.constant 0 : index
    %c0_34 = arith.constant 0 : index
    %47 = vector.load %arg11[%c0_33, %c0_34] : memref<1x256xf32, #tpu.memory_space<vmem>>, vector<1x256xf32>
    %48 = vector.broadcast %47 : vector<1x256xf32> to vector<8x256xf32>
    %49 = arith.addf %46, %48 : vector<8x256xf32>
    %50 = arith.negf %49 : vector<8x256xf32>
    %51 = math.exp %50 : vector<8x256xf32>
    %cst_35 = arith.constant 1.000000e+00 : f32
    %52 = vector.broadcast %cst_35 : f32 to vector<8x256xf32>
    %53 = arith.addf %52, %51 : vector<8x256xf32>
    %54 = arith.divf %52, %53 : vector<8x256xf32>
    %55 = arith.truncf %54 : vector<8x256xf32> to vector<8x256xbf16>
    %c0_36 = arith.constant 0 : index
    %c0_37 = arith.constant 0 : index
    %56 = vector.load %arg12[%c0_36, %c0_37] : memref<8x256xbf16, #tpu.memory_space<vmem>>, vector<8x256xbf16>
    tpu.vector_store %arg12[%c0_36, %c0_37], %55 {strides = array<i32>} : memref<8x256xbf16, #tpu.memory_space<vmem>>, vector<8x256xbf16>,
    return
  }
}

</mosaic_0001>

<llo_original>
// kernel: vae_forward.1
$region0: #{vae_forward.1}
  #allocation0 [shape = 'u32[]', space=smem, size = 0x4, offset = 0x4, fixed_abs, tag = 'smem constant byte address 0x4 - core index']
  #allocation1 [shape = 'u32[144,128]{1,0:T(1,128)}', space=vmem, size = 0x12000, scoped, tag = 'internal scratch']
  %s0 = inlined_call_operand.vmem [shape: f32[8,256], index: 0, kind: input, shape index: {}]
  %s1 = inlined_call_operand.vmem [shape: f32[8,64], index: 1, kind: input, shape index: {}]
  %s2 = inlined_call_operand.vmem [shape: bf16[256,128], index: 2, kind: input, shape index: {}]
  %s3 = inlined_call_operand.vmem [shape: f32[1,128], index: 3, kind: input, shape index: {}]
  %s4 = inlined_call_operand.hbm [shape: bf16[128,128], index: 4, kind: input, shape index: {}]
  %s5 = inlined_call_operand.vmem [shape: f32[1,128], index: 5, kind: input, shape index: {}]
  %s6 = inlined_call_operand.hbm [shape: bf16[128,128], index: 6, kind: input, shape index: {}]
  %s7 = inlined_call_operand.vmem [shape: f32[1,128], index: 7, kind: input, shape index: {}]
  %s8 = inlined_call_operand.hbm [shape: bf16[64,128], index: 8, kind: input, shape index: {}]
  %s9 = inlined_call_operand.vmem [shape: f32[1,128], index: 9, kind: input, shape index: {}]
  %s10 = inlined_call_operand.hbm [shape: bf16[128,256], index: 10, kind: input, shape index: {}]
  %s11 = inlined_call_operand.vmem [shape: f32[1,256], index: 11, kind: input, shape index: {}]
  %s12 = inlined_call_operand.hbm [shape: bf16[8,256], index: 12, kind: output, shape index: {0}]
  %s13 = inlined_call_operand.hbm [shape: f32[8,64], index: 13, kind: output, shape index: {1}]
  %s14 = inlined_call_operand.hbm [shape: f32[8,64], index: 14, kind: output, shape index: {2}]
  %15 = xla_tuple %s12, %s13, %s14
  %s16 = sld [smem:[#allocation0]]
  $region90: #{vae_forward.1} parent=0
    _
  %s18 = ssub.s32 1, %s16
  %s19 = scalar_select 0, %s18, %s16
  $region1: #{vae_forward.1} parent=0
    #allocation2 [shape = 'u8[32768]{0}', space=vmem, size = 0x8000, scoped, tag = 'input window, operand 4, single buffered']
    #allocation3 [shape = 's32[1]{0}', space=sflag, size = 0x4, scoped, tag = 'scoped memory for vae_forward.1']
    #allocation4 [shape = 's32[1]{0}', space=sflag, size = 0x4, scoped, tag = 'scoped memory for vae_forward.1']
    #allocation5 [shape = 'u8[32768]{0}', space=vmem, size = 0x8000, scoped, tag = 'input window, operand 6, single buffered']
    #allocation6 [shape = 's32[1]{0}', space=sflag, size = 0x4, scoped, tag = 'scoped memory for vae_forward.1']
    #allocation7 [shape = 'u8[16384]{0}', space=vmem, size = 0x4000, scoped, tag = 'input window, operand 8, single buffered']
    #allocation8 [shape = 'u8[65536]{0}', space=vmem, size = 0x10000, scoped, tag = 'input window, operand 10, single buffered']
    #allocation9 [shape = 's32[1]{0}', space=sflag, size = 0x4, scoped, tag = 'scoped memory for vae_forward.1']
    #allocation10 [shape = 'u8[4096]{0}', space=vmem, size = 0x1000, scoped, tag = 'output window, operand 0, single buffered']
    #allocation11 [shape = 'u8[4096]{0}', space=vmem, size = 0x1000, scoped, tag = 'output window, operand 1, single buffered']
    #allocation12 [shape = 's32[1]{0}', space=sflag, size = 0x4, scoped, tag = 'scoped memory for vae_forward.1']
    #allocation13 [shape = 'u8[4096]{0}', space=vmem, size = 0x1000, scoped, tag = 'output window, operand 2, single buffered']
    %20 = vsyncpa [#allocation3], 0
    %21 = vsyncpa [#allocation6], 0
    %22 = vsyncpa [#allocation9], 0
    %23 = vsyncpa [#allocation4], 0
    %24 = vsyncpa [#allocation12], 0
    // Predicated region
    $region2: #{vae_forward.1} parent=1 // pred_check
      _
    $region3: #{vae_forward.1} parent=1 // pred_check_branch
      %26 = sbr.rel (0) target = $region5
    $region4: #{vae_forward.1} parent=1 // pred_region
      _
    $region5: #{vae_forward.1} parent=1 // pred_fallthru
      _
    // Predicated region
    $region6: #{vae_forward.1} parent=1 // pred_check
      _
    $region7: #{vae_forward.1} parent=1 // pred_check_branch
      %28 = sbr.rel (0) target = $region9
    $region8: #{vae_forward.1} parent=1 // pred_region
      _
    $region9: #{vae_forward.1} parent=1 // pred_fallthru
      _
    // Predicated region
    $region10: #{vae_forward.1} parent=1 // pred_check
      _
    $region11: #{vae_forward.1} parent=1 // pred_check_branch
      %30 = sbr.rel (0) target = $region13
    $region12: #{vae_forward.1} parent=1 // pred_region
      _
    $region13: #{vae_forward.1} parent=1 // pred_fallthru
      _
    // Predicated region
    $region14: #{vae_forward.1} parent=1 // pred_check
      _
    $region15: #{vae_forward.1} parent=1 // pred_check_branch
      %32 = sbr.rel (0) target = $region17
    $region16: #{vae_forward.1} parent=1 // pred_region
      _
    $region17: #{vae_forward.1} parent=1 // pred_fallthru
      _
    // Predicated region
    $region18: #{vae_forward.1} parent=1 // pred_check
      _
    $region19: #{vae_forward.1} parent=1 // pred_check_branch
      %34 = sbr.rel (0) target = $region21
    $region20: #{vae_forward.1} parent=1 // pred_region
      %s36 = ssub.s32 1024, 1024
      %37 = vsyncadd [#allocation3], %s36
      %s38 = sshll.u32 [#allocation2], 4
      %s39 = int_to_ptr.vmem [resolvable:$true] %s38
      %44 = dma.hbm_to_vmem [thread:$0]  %s4, 1024, %s39, [#allocation3], 64, 64, 4
    $region21: #{vae_forward.1} parent=1 // pred_fallthru
      _
    // Predicated region
    $region22: #{vae_forward.1} parent=1 // pred_check
      _
    $region23: #{vae_forward.1} parent=1 // pred_check_branch
      %46 = sbr.rel (0) target = $region25
    $region24: #{vae_forward.1} parent=1 // pred_region
      _
    $region25: #{vae_forward.1} parent=1 // pred_fallthru
      _
    // Predicated region
    $region26: #{vae_forward.1} parent=1 // pred_check
      _
    $region27: #{vae_forward.1} parent=1 // pred_check_branch
      %48 = sbr.rel (0) target = $region29
    $region28: #{vae_forward.1} parent=1 // pred_region
      %s50 = ssub.s32 1024, 1024
      %51 = vsyncadd [#allocation6], %s50
      %s52 = sshll.u32 [#allocation5], 4
      %s53 = int_to_ptr.vmem [resolvable:$true] %s52
      %58 = dma.hbm_to_vmem [thread:$0]  %s6, 1024, %s53, [#allocation6], 64, 64, 4
    $region29: #{vae_forward.1} parent=1 // pred_fallthru
      _
    // Predicated region
    $region30: #{vae_forward.1} parent=1 // pred_check
      _
    $region31: #{vae_forward.1} parent=1 // pred_check_branch
      %60 = sbr.rel (0) target = $region33
    $region32: #{vae_forward.1} parent=1 // pred_region
      _
    $region33: #{vae_forward.1} parent=1 // pred_fallthru
      _
    // Predicated region
    $region34: #{vae_forward.1} parent=1 // pred_check
      _
    $region35: #{vae_forward.1} parent=1 // pred_check_branch
      %62 = sbr.rel (0) target = $region37
    $region36: #{vae_forward.1} parent=1 // pred_region
      %s64 = ssub.s32 512, 512
      %65 = vsyncadd [#allocation6], %s64
      %s66 = sshll.u32 [#allocation7], 4
      %s67 = int_to_ptr.vmem [resolvable:$true] %s66
      %72 = dma.hbm_to_vmem [thread:$0]  %s8, 512, %s67, [#allocation6], 64, 64, 4
    $region37: #{vae_forward.1} parent=1 // pred_fallthru
      _
    // Predicated region
    $region38: #{vae_forward.1} parent=1 // pred_check
      _
    $region39: #{vae_forward.1} parent=1 // pred_check_branch
      %74 = sbr.rel (0) target = $region41
    $region40: #{vae_forward.1} parent=1 // pred_region
      _
    $region41: #{vae_forward.1} parent=1 // pred_fallthru
      _
    // Predicated region
    $region42: #{vae_forward.1} parent=1 // pred_check
      _
    $region43: #{vae_forward.1} parent=1 // pred_check_branch
      %76 = sbr.rel (0) target = $region45
    $region44: #{vae_forward.1} parent=1 // pred_region
      %s78 = ssub.s32 2048, 2048
      %79 = vsyncadd [#allocation9], %s78
      %s80 = sshll.u32 [#allocation8], 4
      %s81 = int_to_ptr.vmem [resolvable:$true] %s80
      %86 = dma.hbm_to_vmem [thread:$0]  %s10, 2048, %s81, [#allocation9], 128, 128, 8
    $region45: #{vae_forward.1} parent=1 // pred_fallthru
      _
    // Predicated region
    $region46: #{vae_forward.1} parent=1 // pred_check
      _
    $region47: #{vae_forward.1} parent=1 // pred_check_branch
      %88 = sbr.rel (0) target = $region49
    $region48: #{vae_forward.1} parent=1 // pred_region
      _
    $region49: #{vae_forward.1} parent=1 // pred_fallthru
      _
    // Predicated region
    $region50: #{vae_forward.1} parent=1 // pred_check
      _
    $region51: #{vae_forward.1} parent=1 // pred_check_branch
      %90 = sbr.rel (0) target = $region53
    $region52: #{vae_forward.1} parent=1 // pred_region
      %91 = dma.done [#allocation3], 1024
    $region53: #{vae_forward.1} parent=1 // pred_fallthru
      _
    // Predicated region
    $region54: #{vae_forward.1} parent=1 // pred_check
      _
    $region55: #{vae_forward.1} parent=1 // pred_check_branch
      %93 = sbr.rel (0) target = $region57
    $region56: #{vae_forward.1} parent=1 // pred_region
      %94 = dma.done [#allocation6], 1024
    $region57: #{vae_forward.1} parent=1 // pred_fallthru
      _
    // Predicated region
    $region58: #{vae_forward.1} parent=1 // pred_check
      _
    $region59: #{vae_forward.1} parent=1 // pred_check_branch
      %96 = sbr.rel (0) target = $region61
    $region60: #{vae_forward.1} parent=1 // pred_region
      %97 = dma.done [#allocation6], 512
    $region61: #{vae_forward.1} parent=1 // pred_fallthru
      _
    // Predicated region
    $region62: #{vae_forward.1} parent=1 // pred_check
      _
    $region63: #{vae_forward.1} parent=1 // pred_check_branch
      %99 = sbr.rel (0) target = $region65
    $region64: #{vae_forward.1} parent=1 // pred_region
      %100 = dma.done [#allocation9], 2048
    $region65: #{vae_forward.1} parent=1 // pred_fallthru
      _
    %v102 = vld [vmem:[%s0] sm:$0xff]
    %v103 = vld [vmem:[%s0 + $0x8] sm:$0xff]
    %v104 = vpack.c.bf16 %v102, %v102
    %v105 = vpack.c.bf16 %v103, %v103
    %v106 = vld [vmem:[%s1] sm:$0xff]
    %v107 = vld [vmem:[%s2] sm:$0xf]
    %v108 = vld [vmem:[%s2 + $0x4] sm:$0xf]
    %v109 = vld [vmem:[%s2 + $0x8] sm:$0xf]
    %v110 = vld [vmem:[%s2 + $0xc] sm:$0xf]
    %v111 = vld [vmem:[%s2 + $0x10] sm:$0xf]
    %v112 = vld [vmem:[%s2 + $0x14] sm:$0xf]
    %v113 = vld [vmem:[%s2 + $0x18] sm:$0xf]
    %v114 = vld [vmem:[%s2 + $0x1c] sm:$0xf]
    %v115 = vld [vmem:[%s2 + $0x20] sm:$0xf]
    %v116 = vld [vmem:[%s2 + $0x24] sm:$0xf]
    %v117 = vld [vmem:[%s2 + $0x28] sm:$0xf]
    %v118 = vld [vmem:[%s2 + $0x2c] sm:$0xf]
    %v119 = vld [vmem:[%s2 + $0x30] sm:$0xf]
    %v120 = vld [vmem:[%s2 + $0x34] sm:$0xf]
    %v121 = vld [vmem:[%s2 + $0x38] sm:$0xf]
    %v122 = vld [vmem:[%s2 + $0x3c] sm:$0xf]
    %v123 = vld [vmem:[%s2 + $0x40] sm:$0xf]
    %v124 = vld [vmem:[%s2 + $0x44] sm:$0xf]
    %v125 = vld [vmem:[%s2 + $0x48] sm:$0xf]
    %v126 = vld [vmem:[%s2 + $0x4c] sm:$0xf]
    %v127 = vld [vmem:[%s2 + $0x50] sm:$0xf]
    %v128 = vld [vmem:[%s2 + $0x54] sm:$0xf]
    %v129 = vld [vmem:[%s2 + $0x58] sm:$0xf]
    %v130 = vld [vmem:[%s2 + $0x5c] sm:$0xf]
    %v131 = vld [vmem:[%s2 + $0x60] sm:$0xf]
    %v132 = vld [vmem:[%s2 + $0x64] sm:$0xf]
    %v133 = vld [vmem:[%s2 + $0x68] sm:$0xf]
    %v134 = vld [vmem:[%s2 + $0x6c] sm:$0xf]
    %v135 = vld [vmem:[%s2 + $0x70] sm:$0xf]
    %v136 = vld [vmem:[%s2 + $0x74] sm:$0xf]
    %v137 = vld [vmem:[%s2 + $0x78] sm:$0xf]
    %v138 = vld [vmem:[%s2 + $0x7c] sm:$0xf]
    %v139 = vld [vmem:[%s3] sm:$0x1]
    %v141 = vlaneseq
    %v142 = vshrl.u32 %v141, 7
    %v143 = vsub.s32 0, %v142
    %v144 = vrot.slane %v139, %v143
    %v178 = vunpack.c.l.b16 %v107
    %v179 = vunpack.c.l.b16 %v108
    %v180 = vunpack.c.l.b16 %v109
    %v181 = vunpack.c.l.b16 %v110
    %v182 = vunpack.c.l.b16 %v111
    %v183 = vunpack.c.l.b16 %v112
    %v184 = vunpack.c.l.b16 %v113
    %v185 = vunpack.c.l.b16 %v114
    %v186 = vunpack.c.l.b16 %v115
    %v187 = vunpack.c.l.b16 %v116
    %v188 = vunpack.c.l.b16 %v117
    %v189 = vunpack.c.l.b16 %v118
    %v190 = vunpack.c.l.b16 %v119
    %v191 = vunpack.c.l.b16 %v120
    %v192 = vunpack.c.l.b16 %v121
    %v193 = vunpack.c.l.b16 %v122
    %v194 = vunpack.c.l.b16 %v123
    %v195 = vunpack.c.l.b16 %v124
    %v196 = vunpack.c.l.b16 %v125
    %v197 = vunpack.c.l.b16 %v126
    %v198 = vunpack.c.l.b16 %v127
    %v199 = vunpack.c.l.b16 %v128
    %v200 = vunpack.c.l.b16 %v129
    %v201 = vunpack.c.l.b16 %v130
    %v202 = vunpack.c.l.b16 %v131
    %v203 = vunpack.c.l.b16 %v132
    %v204 = vunpack.c.l.b16 %v133
    %v205 = vunpack.c.l.b16 %v134
    %v206 = vunpack.c.l.b16 %v135
    %v207 = vunpack.c.l.b16 %v136
    %v208 = vunpack.c.l.b16 %v137
    %v209 = vunpack.c.l.b16 %v138
    %v210 = vpack.c.b16 %v179, %v178
    %v211 = vpack.c.b16 %v181, %v180
    %v212 = vpack.c.b16 %v183, %v182
    %v213 = vpack.c.b16 %v185, %v184
    %v214 = vpack.c.b16 %v187, %v186
    %v215 = vpack.c.b16 %v189, %v188
    %v216 = vpack.c.b16 %v191, %v190
    %v217 = vpack.c.b16 %v193, %v192
    %v218 = vpack.c.b16 %v195, %v194
    %v219 = vpack.c.b16 %v197, %v196
    %v220 = vpack.c.b16 %v199, %v198
    %v221 = vpack.c.b16 %v201, %v200
    %v222 = vpack.c.b16 %v203, %v202
    %v223 = vpack.c.b16 %v205, %v204
    %v224 = vpack.c.b16 %v207, %v206
    %v225 = vpack.c.b16 %v209, %v208
    %242 = vmatprep.subr.bf16.mxu0 0
    %243 = vmatpush1.bf16.msra.mxu0 %v217
    %244 = vmatprep.subr.bf16.mxu0 0
    %245 = vmatpush1.bf16.msra.mxu0 %v216
    %246 = vmatprep.subr.bf16.mxu0 0
    %247 = vmatpush1.bf16.msra.mxu0 %v215
    %248 = vmatprep.subr.bf16.mxu0 0
    %249 = vmatpush1.bf16.msra.mxu0 %v214
    %250 = vmatprep.subr.bf16.mxu0 0
    %251 = vmatpush1.bf16.msra.mxu0 %v213
    %252 = vmatprep.subr.bf16.mxu0 0
    %253 = vmatpush1.bf16.msra.mxu0 %v212
    %254 = vmatprep.subr.bf16.mxu0 0
    %255 = vmatpush1.bf16.msra.mxu0 %v211
    %256 = vmatprep.subr.bf16.mxu0 0
    %257 = vmatpush1.bf16.msra.mxu0 %v210
    %258 = vmatprep.subr.bf16.mxu0 0
    %259 = vmatpush2.bf16.msra.mxu0 %v225
    %260 = vmatprep.subr.bf16.mxu0 0
    %261 = vmatpush2.bf16.msra.mxu0 %v224
    %262 = vmatprep.subr.bf16.mxu0 0
    %263 = vmatpush2.bf16.msra.mxu0 %v223
    %264 = vmatprep.subr.bf16.mxu0 0
    %265 = vmatpush2.bf16.msra.mxu0 %v222
    %266 = vmatprep.subr.bf16.mxu0 0
    %267 = vmatpush2.bf16.msra.mxu0 %v221
    %268 = vmatprep.subr.bf16.mxu0 0
    %269 = vmatpush2.bf16.msra.mxu0 %v220
    %270 = vmatprep.subr.bf16.mxu0 0
    %271 = vmatpush2.bf16.msra.mxu0 %v219
    %272 = vmatprep.subr.bf16.mxu0 0
    %273 = vmatpush2.bf16.msra.mxu0 %v218
    %274 = vmatprep.mubr.bf16.mxu0 %v105
    %275 = vmatmul.mubr.bf16.gmra.mxu0 %v104
    %v276 = vpop.f32.mrf.mxu0
    %v277 = vadd.f32 %v144, %v276
    %v278 = vpop.f32.mrf.mxu0
    %v279 = vpop.f32.mrf.mxu0
    %v280 = vpop.f32.mrf.mxu0
    %281 = vdwg.mxu0
    %v282 = vmul.f32 %v277, 0.1
    %v283 = vmax.f32 %v277, %v282
    %v284 = vpack.c.bf16 %v283, %v283
    %v285 = vld [vmem:[#allocation2] sm:$0xf]
    %v286 = vld [vmem:[#allocation2 + $0x4] sm:$0xf]
    %v287 = vld [vmem:[#allocation2 + $0x8] sm:$0xf]
    %v288 = vld [vmem:[#allocation2 + $0xc] sm:$0xf]
    %v289 = vld [vmem:[#allocation2 + $0x10] sm:$0xf]
    %v290 = vld [vmem:[#allocation2 + $0x14] sm:$0xf]
    %v291 = vld [vmem:[#allocation2 + $0x18] sm:$0xf]
    %v292 = vld [vmem:[#allocation2 + $0x1c] sm:$0xf]
    %v293 = vld [vmem:[#allocation2 + $0x20] sm:$0xf]
    %v294 = vld [vmem:[#allocation2 + $0x24] sm:$0xf]
    %v295 = vld [vmem:[#allocation2 + $0x28] sm:$0xf]
    %v296 = vld [vmem:[#allocation2 + $0x2c] sm:$0xf]
    %v297 = vld [vmem:[#allocation2 + $0x30] sm:$0xf]
    %v298 = vld [vmem:[#allocation2 + $0x34] sm:$0xf]
    %v299 = vld [vmem:[#allocation2 + $0x38] sm:$0xf]
    %v300 = vld [vmem:[#allocation2 + $0x3c] sm:$0xf]
    %v301 = vld [vmem:[%s5] sm:$0x1]
    %v303 = vlaneseq
    %v304 = vshrl.u32 %v303, 7
    %v305 = vsub.s32 0, %v304
    %v306 = vrot.slane %v301, %v305
    %v324 = vunpack.c.l.b16 %v285
    %v325 = vunpack.c.l.b16 %v286
    %v326 = vunpack.c.l.b16 %v287
    %v327 = vunpack.c.l.b16 %v288
    %v328 = vunpack.c.l.b16 %v289
    %v329 = vunpack.c.l.b16 %v290
    %v330 = vunpack.c.l.b16 %v291
    %v331 = vunpack.c.l.b16 %v292
    %v332 = vunpack.c.l.b16 %v293
    %v333 = vunpack.c.l.b16 %v294
    %v334 = vunpack.c.l.b16 %v295
    %v335 = vunpack.c.l.b16 %v296
    %v336 = vunpack.c.l.b16 %v297
    %v337 = vunpack.c.l.b16 %v298
    %v338 = vunpack.c.l.b16 %v299
    %v339 = vunpack.c.l.b16 %v300
    %v340 = vpack.c.b16 %v325, %v324
    %v341 = vpack.c.b16 %v327, %v326
    %v342 = vpack.c.b16 %v329, %v328
    %v343 = vpack.c.b16 %v331, %v330
    %v344 = vpack.c.b16 %v333, %v332
    %v345 = vpack.c.b16 %v335, %v334
    %v346 = vpack.c.b16 %v337, %v336
    %v347 = vpack.c.b16 %v339, %v338
    %356 = vmatprep.subr.bf16.mxu0 0
    %357 = vmatpush1.bf16.msra.mxu0 %v347
    %358 = vmatprep.subr.bf16.mxu0 0
    %359 = vmatpush1.bf16.msra.mxu0 %v346
    %360 = vmatprep.subr.bf16.mxu0 0
    %361 = vmatpush1.bf16.msra.mxu0 %v345
    %362 = vmatprep.subr.bf16.mxu0 0
    %363 = vmatpush1.bf16.msra.mxu0 %v344
    %364 = vmatprep.subr.bf16.mxu0 0
    %365 = vmatpush1.bf16.msra.mxu0 %v343
    %366 = vmatprep.subr.bf16.mxu0 0
    %367 = vmatpush1.bf16.msra.mxu0 %v342
    %368 = vmatprep.subr.bf16.mxu0 0
    %369 = vmatpush1.bf16.msra.mxu0 %v341
    %370 = vmatprep.subr.bf16.mxu0 0
    %371 = vmatpush1.bf16.msra.mxu0 %v340
    %372 = vmatprep.subr.bf16.mxu0 0
    %373 = vmatpush2.bf16.msra.mxu0 0
    %374 = vmatprep.subr.bf16.mxu0 0
    %375 = vmatpush2.bf16.msra.mxu0 0
    %376 = vmatprep.subr.bf16.mxu0 0
    %377 = vmatpush2.bf16.msra.mxu0 0
    %378 = vmatprep.subr.bf16.mxu0 0
    %379 = vmatpush2.bf16.msra.mxu0 0
    %380 = vmatprep.subr.bf16.mxu0 0
    %381 = vmatpush2.bf16.msra.mxu0 0
    %382 = vmatprep.subr.bf16.mxu0 0
    %383 = vmatpush2.bf16.msra.mxu0 0
    %384 = vmatprep.subr.bf16.mxu0 0
    %385 = vmatpush2.bf16.msra.mxu0 0
    %386 = vmatprep.subr.bf16.mxu0 0
    %387 = vmatpush2.bf16.msra.mxu0 0
    %388 = vmatprep.mubr.bf16.mxu0 0
    %389 = vmatmul.mubr.bf16.gmra.mxu0 %v284
    %v390 = vpop.f32.mrf.mxu0
    %v391 = vadd.f32 %v306, %v390
    %v392 = vpop.f32.mrf.mxu0
    %v393 = vpop.f32.mrf.mxu0
    %v394 = vpop.f32.mrf.mxu0
    %395 = vdwg.mxu0
    %v396 = vmul.f32 %v391, 0.1
    %v397 = vmax.f32 %v391, %v396
    %v398 = vpack.c.bf16 %v397, %v397
    %v399 = vld [vmem:[#allocation5] sm:$0xf]
    %v400 = vld [vmem:[#allocation5 + $0x4] sm:$0xf]
    %v401 = vld [vmem:[#allocation5 + $0x8] sm:$0xf]
    %v402 = vld [vmem:[#allocation5 + $0xc] sm:$0xf]
    %v403 = vld [vmem:[#allocation5 + $0x10] sm:$0xf]
    %v404 = vld [vmem:[#allocation5 + $0x14] sm:$0xf]
    %v405 = vld [vmem:[#allocation5 + $0x18] sm:$0xf]
    %v406 = vld [vmem:[#allocation5 + $0x1c] sm:$0xf]
    %v407 = vld [vmem:[#allocation5 + $0x20] sm:$0xf]
    %v408 = vld [vmem:[#allocation5 + $0x24] sm:$0xf]
    %v409 = vld [vmem:[#allocation5 + $0x28] sm:$0xf]
    %v410 = vld [vmem:[#allocation5 + $0x2c] sm:$0xf]
    %v411 = vld [vmem:[#allocation5 + $0x30] sm:$0xf]
    %v412 = vld [vmem:[#allocation5 + $0x34] sm:$0xf]
    %v413 = vld [vmem:[#allocation5 + $0x38] sm:$0xf]
    %v414 = vld [vmem:[#allocation5 + $0x3c] sm:$0xf]
    %v415 = vld [vmem:[%s7] sm:$0x1]
    %v417 = vlaneseq
    %v418 = vshrl.u32 %v417, 7
    %v419 = vsub.s32 0, %v418
    %v420 = vrot.slane %v415, %v419
    %v438 = vunpack.c.l.b16 %v399
    %v439 = vunpack.c.l.b16 %v400
    %v440 = vunpack.c.l.b16 %v401
    %v441 = vunpack.c.l.b16 %v402
    %v442 = vunpack.c.l.b16 %v403
    %v443 = vunpack.c.l.b16 %v404
    %v444 = vunpack.c.l.b16 %v405
    %v445 = vunpack.c.l.b16 %v406
    %v446 = vunpack.c.l.b16 %v407
    %v447 = vunpack.c.l.b16 %v408
    %v448 = vunpack.c.l.b16 %v409
    %v449 = vunpack.c.l.b16 %v410
    %v450 = vunpack.c.l.b16 %v411
    %v451 = vunpack.c.l.b16 %v412
    %v452 = vunpack.c.l.b16 %v413
    %v453 = vunpack.c.l.b16 %v414
    %v454 = vpack.c.b16 %v439, %v438
    %v455 = vpack.c.b16 %v441, %v440
    %v456 = vpack.c.b16 %v443, %v442
    %v457 = vpack.c.b16 %v445, %v444
    %v458 = vpack.c.b16 %v447, %v446
    %v459 = vpack.c.b16 %v449, %v448
    %v460 = vpack.c.b16 %v451, %v450
    %v461 = vpack.c.b16 %v453, %v452
    %470 = vmatprep.subr.bf16.mxu0 0
    %471 = vmatpush1.bf16.msra.mxu0 %v461
    %472 = vmatprep.subr.bf16.mxu0 0
    %473 = vmatpush1.bf16.msra.mxu0 %v460
    %474 = vmatprep.subr.bf16.mxu0 0
    %475 = vmatpush1.bf16.msra.mxu0 %v459
    %476 = vmatprep.subr.bf16.mxu0 0
    %477 = vmatpush1.bf16.msra.mxu0 %v458
    %478 = vmatprep.subr.bf16.mxu0 0
    %479 = vmatpush1.bf16.msra.mxu0 %v457
    %480 = vmatprep.subr.bf16.mxu0 0
    %481 = vmatpush1.bf16.msra.mxu0 %v456
    %482 = vmatprep.subr.bf16.mxu0 0
    %483 = vmatpush1.bf16.msra.mxu0 %v455
    %484 = vmatprep.subr.bf16.mxu0 0
    %485 = vmatpush1.bf16.msra.mxu0 %v454
    %486 = vmatprep.subr.bf16.mxu0 0
    %487 = vmatpush2.bf16.msra.mxu0 0
    %488 = vmatprep.subr.bf16.mxu0 0
    %489 = vmatpush2.bf16.msra.mxu0 0
    %490 = vmatprep.subr.bf16.mxu0 0
    %491 = vmatpush2.bf16.msra.mxu0 0
    %492 = vmatprep.subr.bf16.mxu0 0
    %493 = vmatpush2.bf16.msra.mxu0 0
    %494 = vmatprep.subr.bf16.mxu0 0
    %495 = vmatpush2.bf16.msra.mxu0 0
    %496 = vmatprep.subr.bf16.mxu0 0
    %497 = vmatpush2.bf16.msra.mxu0 0
    %498 = vmatprep.subr.bf16.mxu0 0
    %499 = vmatpush2.bf16.msra.mxu0 0
    %500 = vmatprep.subr.bf16.mxu0 0
    %501 = vmatpush2.bf16.msra.mxu0 0
    %502 = vmatprep.mubr.bf16.mxu0 0
    %503 = vmatmul.mubr.bf16.gmra.mxu0 %v398
    %v504 = vpop.f32.mrf.mxu0
    %v505 = vadd.f32 %v420, %v504
    %v506 = vpop.f32.mrf.mxu0
    %v507 = vpop.f32.mrf.mxu0
    %v508 = vpop.f32.mrf.mxu0
    %509 = vdwg.mxu0
    %vm510 = vcmask 523264
    %511 = vst.msk [vmem:[#allocation11] sm:$0xff] %vm510, %v505
    %513 = vrot.lane.b32.xlu0 %v505, 64
    %v514 = vpop.permute.xlu0 %513
    %516 = vst.msk [vmem:[#allocation13] sm:$0xff] %vm510, %v514
    %v517 = vmul.f32 %v505, 0.5
    %v518 = vmul.f32 %v517, 1.442695
    %v519 = vpow.pop %v518
    %521 = vrot.lane.b32.xlu0 %v519, 64
    %v522 = vpop.permute.xlu0 %521
    %v524 = vmul.f32 %v106, %v522
    %v525 = vadd.f32 %v505, %v524
    %v526 = vpack.c.bf16 %v525, %v525
    %v527 = vld [vmem:[#allocation7] sm:$0xf]
    %v528 = vld [vmem:[#allocation7 + $0x4] sm:$0xf]
    %v529 = vld [vmem:[#allocation7 + $0x8] sm:$0xf]
    %v530 = vld [vmem:[#allocation7 + $0xc] sm:$0xf]
    %v531 = vld [vmem:[#allocation7 + $0x10] sm:$0xf]
    %v532 = vld [vmem:[#allocation7 + $0x14] sm:$0xf]
    %v533 = vld [vmem:[#allocation7 + $0x18] sm:$0xf]
    %v534 = vld [vmem:[#allocation7 + $0x1c] sm:$0xf]
    %v535 = vld [vmem:[%s9] sm:$0x1]
    %v537 = vlaneseq
    %v538 = vshrl.u32 %v537, 7
    %v539 = vsub.s32 0, %v538
    %v540 = vrot.slane %v535, %v539
    %v550 = vunpack.c.l.b16 %v527
    %v551 = vunpack.c.l.b16 %v528
    %v552 = vunpack.c.l.b16 %v529
    %v553 = vunpack.c.l.b16 %v530
    %v554 = vunpack.c.l.b16 %v531
    %v555 = vunpack.c.l.b16 %v532
    %v556 = vunpack.c.l.b16 %v533
    %v557 = vunpack.c.l.b16 %v534
    %v558 = vpack.c.b16 %v551, %v550
    %v559 = vpack.c.b16 %v553, %v552
    %v560 = vpack.c.b16 %v555, %v554
    %v561 = vpack.c.b16 %v557, %v556
    %v567 = vsel %vm510, %v526, 0
    %569 = vmatprep.subr.bf16.mxu0 0
    %570 = vmatpush1.bf16.msra.mxu0 0
    %571 = vmatprep.subr.bf16.mxu0 0
    %572 = vmatpush1.bf16.msra.mxu0 0
    %573 = vmatprep.subr.bf16.mxu0 0
    %574 = vmatpush1.bf16.msra.mxu0 0
    %575 = vmatprep.subr.bf16.mxu0 0
    %576 = vmatpush1.bf16.msra.mxu0 0
    %577 = vmatprep.subr.bf16.mxu0 0
    %578 = vmatpush1.bf16.msra.mxu0 %v561
    %579 = vmatprep.subr.bf16.mxu0 0
    %580 = vmatpush1.bf16.msra.mxu0 %v560
    %581 = vmatprep.subr.bf16.mxu0 0
    %582 = vmatpush1.bf16.msra.mxu0 %v559
    %583 = vmatprep.subr.bf16.mxu0 0
    %584 = vmatpush1.bf16.msra.mxu0 %v558
    %585 = vmatprep.subr.bf16.mxu0 0
    %586 = vmatpush2.bf16.msra.mxu0 0
    %587 = vmatprep.subr.bf16.mxu0 0
    %588 = vmatpush2.bf16.msra.mxu0 0
    %589 = vmatprep.subr.bf16.mxu0 0
    %590 = vmatpush2.bf16.msra.mxu0 0
    %591 = vmatprep.subr.bf16.mxu0 0
    %592 = vmatpush2.bf16.msra.mxu0 0
    %593 = vmatprep.subr.bf16.mxu0 0
    %594 = vmatpush2.bf16.msra.mxu0 0
    %595 = vmatprep.subr.bf16.mxu0 0
    %596 = vmatpush2.bf16.msra.mxu0 0
    %597 = vmatprep.subr.bf16.mxu0 0
    %598 = vmatpush2.bf16.msra.mxu0 0
    %599 = vmatprep.subr.bf16.mxu0 0
    %600 = vmatpush2.bf16.msra.mxu0 0
    %601 = vmatprep.mubr.bf16.mxu0 0
    %602 = vmatmul.mubr.bf16.gmra.mxu0 %v567
    %v603 = vpop.f32.mrf.mxu0
    %v604 = vadd.f32 %v540, %v603
    %v605 = vpop.f32.mrf.mxu0
    %v606 = vpop.f32.mrf.mxu0
    %v607 = vpop.f32.mrf.mxu0
    %608 = vdwg.mxu0
    %v609 = vmul.f32 %v604, 0.1
    %v610 = vmax.f32 %v604, %v609
    %v611 = vpack.c.bf16 %v610, %v610
    %v612 = vld [vmem:[#allocation8] sm:$0xff]
    %v613 = vld [vmem:[#allocation8 + $0x8] sm:$0xff]
    %v614 = vld [vmem:[#allocation8 + $0x10] sm:$0xff]
    %v615 = vld [vmem:[#allocation8 + $0x18] sm:$0xff]
    %v616 = vld [vmem:[#allocation8 + $0x20] sm:$0xff]
    %v617 = vld [vmem:[#allocation8 + $0x28] sm:$0xff]
    %v618 = vld [vmem:[#allocation8 + $0x30] sm:$0xff]
    %v619 = vld [vmem:[#allocation8 + $0x38] sm:$0xff]
    %v620 = vld [vmem:[#allocation8 + $0x40] sm:$0xff]
    %v621 = vld [vmem:[#allocation8 + $0x48] sm:$0xff]
    %v622 = vld [vmem:[#allocation8 + $0x50] sm:$0xff]
    %v623 = vld [vmem:[#allocation8 + $0x58] sm:$0xff]
    %v624 = vld [vmem:[#allocation8 + $0x60] sm:$0xff]
    %v625 = vld [vmem:[#allocation8 + $0x68] sm:$0xff]
    %v626 = vld [vmem:[#allocation8 + $0x70] sm:$0xff]
    %v627 = vld [vmem:[#allocation8 + $0x78] sm:$0xff]
    %v628 = vld [vmem:[%s11] sm:$0x3]
    %v630 = vlaneseq
    %v631 = vshrl.u32 %v630, 7
    %v632 = vsub.s32 0, %v631
    %v633 = vrot.slane %v628, %v632
    %v634 = vlaneseq
    %v635 = vshrl.u32 %v634, 7
    %v636 = vsub.s32 1, %v635
    %v637 = vrot.slane %v628, %v636
    %v656 = vunpack.c.l.b16 %v612
    %v657 = vunpack.c.h.b16 %v612
    %v658 = vunpack.c.l.b16 %v613
    %v659 = vunpack.c.h.b16 %v613
    %v660 = vunpack.c.l.b16 %v614
    %v661 = vunpack.c.h.b16 %v614
    %v662 = vunpack.c.l.b16 %v615
    %v663 = vunpack.c.h.b16 %v615
    %v664 = vunpack.c.l.b16 %v616
    %v665 = vunpack.c.h.b16 %v616
    %v666 = vunpack.c.l.b16 %v617
    %v667 = vunpack.c.h.b16 %v617
    %v668 = vunpack.c.l.b16 %v618
    %v669 = vunpack.c.h.b16 %v618
    %v670 = vunpack.c.l.b16 %v619
    %v671 = vunpack.c.h.b16 %v619
    %v672 = vunpack.c.l.b16 %v620
    %v673 = vunpack.c.h.b16 %v620
    %v674 = vunpack.c.l.b16 %v621
    %v675 = vunpack.c.h.b16 %v621
    %v676 = vunpack.c.l.b16 %v622
    %v677 = vunpack.c.h.b16 %v622
    %v678 = vunpack.c.l.b16 %v623
    %v679 = vunpack.c.h.b16 %v623
    %v680 = vunpack.c.l.b16 %v624
    %v681 = vunpack.c.h.b16 %v624
    %v682 = vunpack.c.l.b16 %v625
    %v683 = vunpack.c.h.b16 %v625
    %v684 = vunpack.c.l.b16 %v626
    %v685 = vunpack.c.h.b16 %v626
    %v686 = vunpack.c.l.b16 %v627
    %v687 = vunpack.c.h.b16 %v627
    %v688 = vpack.c.b16 %v658, %v656
    %v689 = vpack.c.b16 %v659, %v657
    %v690 = vpack.c.b16 %v662, %v660
    %v691 = vpack.c.b16 %v663, %v661
    %v692 = vpack.c.b16 %v666, %v664
    %v693 = vpack.c.b16 %v667, %v665
    %v694 = vpack.c.b16 %v670, %v668
    %v695 = vpack.c.b16 %v671, %v669
    %v696 = vpack.c.b16 %v674, %v672
    %v697 = vpack.c.b16 %v675, %v673
    %v698 = vpack.c.b16 %v678, %v676
    %v699 = vpack.c.b16 %v679, %v677
    %v700 = vpack.c.b16 %v682, %v680
    %v701 = vpack.c.b16 %v683, %v681
    %v702 = vpack.c.b16 %v686, %v684
    %v703 = vpack.c.b16 %v687, %v685
    %720 = vmatprep.subr.bf16.mxu0 %v703
    %721 = vmatpush1.bf16.msra.mxu0 %v702
    %722 = vmatprep.subr.bf16.mxu0 %v701
    %723 = vmatpush1.bf16.msra.mxu0 %v700
    %724 = vmatprep.subr.bf16.mxu0 %v699
    %725 = vmatpush1.bf16.msra.mxu0 %v698
    %726 = vmatprep.subr.bf16.mxu0 %v697
    %727 = vmatpush1.bf16.msra.mxu0 %v696
    %728 = vmatprep.subr.bf16.mxu0 %v695
    %729 = vmatpush1.bf16.msra.mxu0 %v694
    %730 = vmatprep.subr.bf16.mxu0 %v693
    %731 = vmatpush1.bf16.msra.mxu0 %v692
    %732 = vmatprep.subr.bf16.mxu0 %v691
    %733 = vmatpush1.bf16.msra.mxu0 %v690
    %734 = vmatprep.subr.bf16.mxu0 %v689
    %735 = vmatpush1.bf16.msra.mxu0 %v688
    %736 = vmatprep.subr.bf16.mxu0 0
    %737 = vmatpush2.bf16.msra.mxu0 0
    %738 = vmatprep.subr.bf16.mxu0 0
    %739 = vmatpush2.bf16.msra.mxu0 0
    %740 = vmatprep.subr.bf16.mxu0 0
    %741 = vmatpush2.bf16.msra.mxu0 0
    %742 = vmatprep.subr.bf16.mxu0 0
    %743 = vmatpush2.bf16.msra.mxu0 0
    %744 = vmatprep.subr.bf16.mxu0 0
    %745 = vmatpush2.bf16.msra.mxu0 0
    %746 = vmatprep.subr.bf16.mxu0 0
    %747 = vmatpush2.bf16.msra.mxu0 0
    %748 = vmatprep.subr.bf16.mxu0 0
    %749 = vmatpush2.bf16.msra.mxu0 0
    %750 = vmatprep.subr.bf16.mxu0 0
    %751 = vmatpush2.bf16.msra.mxu0 0
    %752 = vmatprep.mubr.bf16.mxu0 0
    %753 = vmatmul.mubr.bf16.gmra.mxu0 %v611
    %v754 = vpop.f32.mrf.mxu0
    %v755 = vadd.f32 %v633, %v754
    %v756 = vpop.f32.mrf.mxu0
    %v757 = vadd.f32 %v637, %v756
    %v758 = vpop.f32.mrf.mxu0
    %v759 = vpop.f32.mrf.mxu0
    %760 = vdwg.mxu0
    %v761 = vxor.u32 %v755, 2147483648
    %v762 = vxor.u32 %v757, 2147483648
    %v763 = vmul.f32 %v761, 1.442695
    %v764 = vpow.pop %v763
    %v765 = vmul.f32 %v762, 1.442695
    %v766 = vpow.pop %v765
    %v767 = vadd.f32 %v764, 1.0
    %v768 = vadd.f32 %v766, 1.0
    %v769 = vrcp.pop %v767
    %v770 = vmul.f32 1.0, %v769
    %v771 = vrcp.pop %v768
    %v772 = vmul.f32 1.0, %v771
    %v773 = vpack.c.bf16 %v770, %v770
    %v774 = vpack.c.bf16 %v772, %v772
    %v777 = vunpack.c.l.b16 %v773
    %v778 = vunpack.c.l.b16 %v774
    %v779 = vpack.c.b16 %v778, %v777
    %781 = vst [vmem:[#allocation10] sm:$0xff] %v779
    // Predicated region
    $region66: #{vae_forward.1} parent=1 // pred_check
      _
    $region67: #{vae_forward.1} parent=1 // pred_check_branch
      %783 = sbr.rel (0) target = $region69
    $region68: #{vae_forward.1} parent=1 // pred_region
      %s785 = ssub.s32 128, 128
      %786 = vsyncadd [#allocation4], %s785
      %s788 = sshll.u32 [#allocation10], 4
      %s789 = int_to_ptr.vmem [resolvable:$true] %s788
      %791 = dma.vmem_to_hbm [thread:$0]  %s789, 128, %s12, [#allocation4]
    $region69: #{vae_forward.1} parent=1 // pred_fallthru
      _
    // Predicated region
    $region70: #{vae_forward.1} parent=1 // pred_check
      _
    $region71: #{vae_forward.1} parent=1 // pred_check_branch
      %793 = sbr.rel (0) target = $region73
    $region72: #{vae_forward.1} parent=1 // pred_region
      %s795 = ssub.s32 128, 128
      %796 = vsyncadd [#allocation12], %s795
      %s798 = sshll.u32 [#allocation11], 4
      %s799 = int_to_ptr.vmem [resolvable:$true] %s798
      %801 = dma.vmem_to_hbm [thread:$0]  %s799, 128, %s13, [#allocation12]
    $region73: #{vae_forward.1} parent=1 // pred_fallthru
      _
    // Predicated region
    $region74: #{vae_forward.1} parent=1 // pred_check
      _
    $region75: #{vae_forward.1} parent=1 // pred_check_branch
      %803 = sbr.rel (0) target = $region77
    $region76: #{vae_forward.1} parent=1 // pred_region
      %s805 = ssub.s32 128, 128
      %806 = vsyncadd [#allocation12], %s805
      %s808 = sshll.u32 [#allocation13], 4
      %s809 = int_to_ptr.vmem [resolvable:$true] %s808
      %811 = dma.vmem_to_hbm [thread:$0]  %s809, 128, %s14, [#allocation12]
    $region77: #{vae_forward.1} parent=1 // pred_fallthru
      _
    // Predicated region
    $region78: #{vae_forward.1} parent=1 // pred_check
      _
    $region79: #{vae_forward.1} parent=1 // pred_check_branch
      %813 = sbr.rel (0) target = $region81
    $region80: #{vae_forward.1} parent=1 // pred_region
      %814 = dma.done [#allocation4], 128
    $region81: #{vae_forward.1} parent=1 // pred_fallthru
      _
    // Predicated region
    $region82: #{vae_forward.1} parent=1 // pred_check
      _
    $region83: #{vae_forward.1} parent=1 // pred_check_branch
      %816 = sbr.rel (0) target = $region85
    $region84: #{vae_forward.1} parent=1 // pred_region
      %817 = dma.done [#allocation12], 128
    $region85: #{vae_forward.1} parent=1 // pred_fallthru
      _
    // Predicated region
    $region86: #{vae_forward.1} parent=1 // pred_check
      _
    $region87: #{vae_forward.1} parent=1 // pred_check_branch
      %819 = sbr.rel (0) target = $region89
    $region88: #{vae_forward.1} parent=1 // pred_region
      %820 = dma.done [#allocation12], 128
    $region89: #{vae_forward.1} parent=1 // pred_fallthru
      _
    %821 = vsyncpa [#allocation3], 1
    %822 = vsyncpa [#allocation6], 1
    %823 = vsyncpa [#allocation9], 1
    %824 = vsyncpa [#allocation4], 1
    %825 = vsyncpa [#allocation12], 1

</llo_original>
